<compile_context>
chip_gen: v6e
topology: v6e:2x2x1
jax: 0.10.0
libtpu: 0.0.40
codegen_flags: <defaults>
</compile_context>

<pallas_src>
import functools

import jax
import jax.numpy as jnp
from jax.experimental import pallas as pl
from jax.experimental.pallas import tpu as pltpu


def _pick_tile(dim, cap, align):
    """Largest tile <= cap that evenly divides `dim` and is a multiple of
    `align`; falls back to the full dim (which is always legal for the TPU
    (8,128)-or-full block rule)."""
    if dim <= cap:
        return dim
    for t in range(cap, 0, -1):
        if dim % t == 0 and t % align == 0:
            return t
    return dim


# ---------------------------------------------------------------------------
# Kernel 1: encode  (mean-pool + LinearHead + L2 normalize)
#   grid = (B//TB, S//TS); batch axis "parallel", seq axis "arbitrary".
# ---------------------------------------------------------------------------
def encode_kernel(hidden_ref, mask_ref, w_ref, reps_ref, sum_ref, cnt_ref):
    s = pl.program_id(1)

    @pl.when(s == 0)
    def _init():
        sum_ref[...] = jnp.zeros_like(sum_ref)
        cnt_ref[...] = jnp.zeros_like(cnt_ref)

    hidden = hidden_ref[...]                          # [TB, TS, H] native dtype
    mask = mask_ref[...]                              # [TB, TS, 1] native dtype

    # mean_pooling numerator/denominator, accumulated in f32 scratch.
    masked = (hidden * mask).astype(jnp.float32)      # lane-broadcast VPU mul
    sum_ref[...] += jnp.sum(masked, axis=1)           # [TB, H]
    cnt_ref[...] += jnp.sum(mask.astype(jnp.float32), axis=1)   # [TB, 1]

    @pl.when(s == pl.num_programs(1) - 1)
    def _finalize():
        # pooled = summed / max(count, 1e-9); reciprocal goes to the EUP and
        # any approx error is a per-row scale that the L2 normalize cancels.
        inv_cnt = pl.reciprocal(jnp.maximum(cnt_ref[...], 1e-9), approx=True)
        pooled = sum_ref[...] * inv_cnt                           # [TB, H]

        # LinearHead: pooled @ W^T  (w_ref already holds W^T = [H, Dout])
        reps = jnp.dot(pooled, w_ref[...],
                       preferred_element_type=jnp.float32)        # [TB, Dout]

        # F.normalize(reps, dim=1), eps = 1e-12  ==  reps * rsqrt(max(ss,1e-24))
        sumsq = jnp.sum(reps * reps, axis=1, keepdims=True)
        inv_norm = jax.lax.rsqrt(jnp.maximum(sumsq, 1e-24))
        reps_ref[...] = (reps * inv_norm).astype(reps_ref.dtype)


def encode_reps(hidden, mask, w_t, *, tb_cap=16, ts_cap=256):
    """hidden: [B, S, H], mask: [B, S], w_t: [H, Dout] (= LinearHead W^T)."""
    B, S, H = hidden.shape
    Dout = w_t.shape[1]

    # Feed the mask already shaped [B, S, 1] so the in-kernel broadcast is a
    # cheap lane broadcast (no XLU relayout).
    mask3 = mask.reshape(B, S, 1).astype(hidden.dtype)

    # Tile caps are sized so (hidden block + mask block) double-buffered plus
    # the weight stays well under the default scoped-VMEM limit; re-derive
    # (roughly halve) for v7x's 64 MiB VMEM if caps are raised.
    TB = _pick_tile(B, tb_cap, 8)
    TS = _pick_tile(S, ts_cap, 8)
    grid = (B // TB, S // TS)

    return pl.pallas_call(
        encode_kernel,
        out_shape=jax.ShapeDtypeStruct((B, Dout), jnp.float32),
        grid_spec=pltpu.PrefetchScalarGridSpec(
            num_scalar_prefetch=0,
            grid=grid,
            in_specs=[
                pl.BlockSpec((TB, TS, H), lambda b, s: (b, s, 0)),
                pl.BlockSpec((TB, TS, 1), lambda b, s: (b, s, 0)),
                pl.BlockSpec((H, Dout), lambda b, s: (0, 0)),
            ],
            out_specs=pl.BlockSpec((TB, Dout), lambda b, s: (b, 0)),
            scratch_shapes=[
                pltpu.VMEM((TB, H), jnp.float32),   # masked-sum accumulator
                pltpu.VMEM((TB, 1), jnp.float32),   # token-count accumulator
            ],
        ),
        compiler_params=pltpu.CompilerParams(
            dimension_semantics=("parallel", "arbitrary")),
    )(hidden, mask3, w_t)


# ---------------------------------------------------------------------------
# Kernel 2: in-batch-negative scores + cross-entropy loss
#   grid over query rows ("arbitrary": loss accumulates across steps).
# ---------------------------------------------------------------------------
def score_loss_kernel(q_ref, p_ref, scores_ref, loss_ref, acc_ref, *,
                      n_passages, num_queries):
    i = pl.program_id(0)

    q = q_ref[...].astype(jnp.float32)                 # [TQ, D]
    p = p_ref[...].astype(jnp.float32)                 # [Bp, D]

    # scores = q @ p.T without materializing the transpose: contract last axes.
    scores = jax.lax.dot_general(
        q, p, dimension_numbers=(((1,), (1,)), ((), ())),
        preferred_element_type=jnp.float32)            # [TQ, Bp]
    scores_ref[...] = scores

    TQ, Bp = scores.shape
    row = jax.lax.broadcasted_iota(jnp.int32, (TQ, Bp), 0)
    col = jax.lax.broadcasted_iota(jnp.int32, (TQ, Bp), 1)
    target_col = (i * TQ + row) * n_passages           # global arange(Bq)*n_p

    # CrossEntropyLoss(reduction='mean') = mean(logsumexp - gold_logit)
    m = jnp.max(scores, axis=1, keepdims=True)
    lse = m + jnp.log(jnp.sum(jnp.exp(scores - m), axis=1, keepdims=True))
    gold = jnp.sum(jnp.where(col == target_col, scores, 0.0),
                   axis=1, keepdims=True)

    @pl.when(i == 0)
    def _init():
        acc_ref[...] = jnp.zeros_like(acc_ref)

    acc_ref[...] += jnp.sum(lse - gold, keepdims=True)

    @pl.when(i == pl.num_programs(0) - 1)
    def _finalize():
        loss_ref[...] = acc_ref[...] * (1.0 / num_queries)


def score_and_loss(q_reps, p_reps, n_passages, *, tq_cap=256):
    Bq, D = q_reps.shape
    Bp = p_reps.shape[0]
    TQ = _pick_tile(Bq, tq_cap, 8)
    kernel = functools.partial(score_loss_kernel, n_passages=n_passages,
                               num_queries=Bq)
    scores, loss = pl.pallas_call(
        kernel,
        out_shape=(
            jax.ShapeDtypeStruct((Bq, Bp), jnp.float32),
            jax.ShapeDtypeStruct((1, 1), jnp.float32),
        ),
        grid_spec=pltpu.PrefetchScalarGridSpec(
            num_scalar_prefetch=0,
            grid=(Bq // TQ,),
            in_specs=[
                pl.BlockSpec((TQ, D), lambda i: (i, 0)),
                pl.BlockSpec((Bp, D), lambda i: (0, 0)),
            ],
            out_specs=(
                pl.BlockSpec((TQ, Bp), lambda i: (i, 0)),
                pl.BlockSpec((1, 1), lambda i: (0, 0)),
            ),
            scratch_shapes=[pltpu.VMEM((1, 1), jnp.float32)],
        ),
        compiler_params=pltpu.CompilerParams(
            dimension_semantics=("arbitrary",)),
    )(q_reps, p_reps)
    return scores, loss[0, 0]


# ---------------------------------------------------------------------------
# DenseModel forward (glue in plain JAX, hot path in Pallas)
# ---------------------------------------------------------------------------
def dense_model_forward(q_hidden, q_mask, p_hidden, p_mask, w_q_t, w_p_t,
                        n_passages):
    q_reps = encode_reps(q_hidden, q_mask, w_q_t)
    p_reps = encode_reps(p_hidden, p_mask, w_p_t)
    scores, loss = score_and_loss(q_reps, p_reps, n_passages)
    return q_reps, p_reps, scores, loss


# pure-JAX reference for correctness check
def _ref_forward(q_hidden, q_mask, p_hidden, p_mask, w_q_t, w_p_t, n_passages):
    def enc(h, m, w):
        pooled = (h * m[:, :, None]).sum(1) / jnp.maximum(
            m.sum(1, keepdims=True), 1e-9)
        r = pooled @ w
        return r / jnp.maximum(jnp.linalg.norm(r, axis=1, keepdims=True), 1e-12)
    q = enc(q_hidden, q_mask, w_q_t)
    p = enc(p_hidden, p_mask, w_p_t)
    scores = q @ p.T
    tgt = jnp.arange(scores.shape[0]) * n_passages
    lse = jax.scipy.special.logsumexp(scores, axis=1)
    loss = jnp.mean(lse - scores[jnp.arange(scores.shape[0]), tgt])
    return q, p, scores, loss


if __name__ == "__main__":
    key = jax.random.PRNGKey(0)

    # small shapes: Bq queries, n_passages per query, seq len S, hidden H,
    # projection Dout kept lane-dense (128) per the perf review.
    Bq, n_passages, S, H, Dout = 2, 2, 8, 32, 128
    Bp = Bq * n_passages

    k1, k2, k3, k4 = jax.random.split(key, 4)
    q_hidden = jax.random.normal(k1, (Bq, S, H), dtype=jnp.float32)
    p_hidden = jax.random.normal(k2, (Bp, S, H), dtype=jnp.float32)

    # attention masks (1 = real token, trailing padding zeros), float32
    q_mask = jnp.concatenate(
        [jnp.ones((Bq, S - 2), jnp.float32), jnp.zeros((Bq, 2), jnp.float32)],
        axis=1)
    p_mask = jnp.concatenate(
        [jnp.ones((Bp, S - 3), jnp.float32), jnp.zeros((Bp, 3), jnp.float32)],
        axis=1)

    # LinearHead weights (nn.Linear(H, Dout, bias=False).weight is [Dout, H];
    # forward does x @ W.T, so pass W.T = [H, Dout] to the kernel)
    w_q = 0.05 * jax.random.normal(k3, (Dout, H), dtype=jnp.float32)
    w_p = 0.05 * jax.random.normal(k4, (Dout, H), dtype=jnp.float32)
    w_q_t, w_p_t = w_q.T, w_p.T

    q_reps, p_reps, scores, loss = dense_model_forward(
        q_hidden, q_mask, p_hidden, p_mask, w_q_t, w_p_t, n_passages)
    jax.block_until_ready((q_reps, p_reps, scores, loss))

    rq, rp, ref_scores, ref_loss = _ref_forward(
        q_hidden, q_mask, p_hidden, p_mask, w_q_t, w_p_t, n_passages)
    assert jnp.allclose(q_reps, rq, atol=1e-5, rtol=1e-4)
    assert jnp.allclose(p_reps, rp, atol=1e-5, rtol=1e-4)
    assert jnp.allclose(scores, ref_scores, atol=1e-5, rtol=1e-4)
    assert jnp.allclose(loss, ref_loss, atol=1e-5, rtol=1e-4)

    print("KERNEL_OK")
</pallas_src>

<mosaic_0001>
module attributes {stable_mosaic.version = 11 : i64} {
  func.func @encode_kernel(%arg0: i32, %arg1: i32, %arg2: memref<2x8x32xf32, #tpu.memory_space<vmem>>, %arg3: memref<2x8x1xf32, #tpu.memory_space<vmem>>, %arg4: memref<32x128xf32, #tpu.memory_space<vmem>>, %arg5: memref<2x128xf32, #tpu.memory_space<vmem>>, %arg6: memref<2x32xf32, #tpu.memory_space<vmem>>, %arg7: memref<2x1xf32, #tpu.memory_space<vmem>>) attributes {dimension_semantics = [#tpu.dimension_semantics<parallel>, #tpu.dimension_semantics<arbitrary>], iteration_bounds = array<i64: 1, 1>, scalar_prefetch = 0 : i64, scratch_operands = 2 : i64, tpu.core_type = #tpu.core_type<tc>, window_params = [{transform_indices = @transform_0, window_bounds = array<i64: 2, 8, 32>}, {transform_indices = @transform_1, window_bounds = array<i64: 2, 8, 1>}, {pipeline_mode = #tpu.pipeline_mode<synchronous>, transform_indices = @transform_2, window_bounds = array<i64: 32, 128>}, {transform_indices = @transform_3, window_bounds = array<i64: 2, 128>}]} {
    %c0_i32 = arith.constant 0 : i32
    %0 = arith.cmpi eq, %arg1, %c0_i32 : i32
    %1 = arith.extui %0 : i1 to i32
    %c0_i32_0 = arith.constant 0 : i32
    %2 = arith.cmpi ne, %1, %c0_i32_0 : i32
    scf.if %2 {
      %cst_17 = arith.constant 0.000000e+00 : f32
      %18 = vector.broadcast %cst_17 : f32 to vector<2x32xf32>
      %c0_18 = arith.constant 0 : index
      %c0_19 = arith.constant 0 : index
      %19 = vector.load %arg6[%c0_18, %c0_19] : memref<2x32xf32, #tpu.memory_space<vmem>>, vector<2x32xf32>
      tpu.vector_store %arg6[%c0_18, %c0_19], %18 {strides = array<i32>} : memref<2x32xf32, #tpu.memory_space<vmem>>, vector<2x32xf32>,
      %cst_20 = arith.constant 0.000000e+00 : f32
      %20 = vector.broadcast %cst_20 : f32 to vector<2x1xf32>
      %c0_21 = arith.constant 0 : index
      %c0_22 = arith.constant 0 : index
      %21 = vector.load %arg7[%c0_21, %c0_22] : memref<2x1xf32, #tpu.memory_space<vmem>>, vector<2x1xf32>
      tpu.vector_store %arg7[%c0_21, %c0_22], %20 {strides = array<i32>} : memref<2x1xf32, #tpu.memory_space<vmem>>, vector<2x1xf32>,
    } else {
    }
    %c0 = arith.constant 0 : index
    %c0_1 = arith.constant 0 : index
    %c0_2 = arith.constant 0 : index
    %3 = vector.load %arg2[%c0, %c0_1, %c0_2] : memref<2x8x32xf32, #tpu.memory_space<vmem>>, vector<2x8x32xf32>
    %c0_3 = arith.constant 0 : index
    %c0_4 = arith.constant 0 : index
    %c0_5 = arith.constant 0 : index
    %4 = vector.load %arg3[%c0_3, %c0_4, %c0_5] : memref<2x8x1xf32, #tpu.memory_space<vmem>>, vector<2x8x1xf32>
    %5 = vector.broadcast %4 : vector<2x8x1xf32> to vector<2x8x32xf32>
    %6 = arith.mulf %3, %5 : vector<2x8x32xf32>
    %c0_6 = arith.constant 0 : index
    %c0_7 = arith.constant 0 : index
    %7 = vector.load %arg6[%c0_6, %c0_7] : memref<2x32xf32, #tpu.memory_space<vmem>>, vector<2x32xf32>
    %cst = arith.constant dense<0.000000e+00> : vector<2x32xf32>
    %8 = vector.multi_reduction <add>, %6, %cst [1] : vector<2x8x32xf32> to vector<2x32xf32>
    %9 = arith.addf %7, %8 : vector<2x32xf32>
    %c0_8 = arith.constant 0 : index
    %c0_9 = arith.constant 0 : index
    %10 = vector.load %arg6[%c0_8, %c0_9] : memref<2x32xf32, #tpu.memory_space<vmem>>, vector<2x32xf32>
    tpu.vector_store %arg6[%c0_8, %c0_9], %9 {strides = array<i32>} : memref<2x32xf32, #tpu.memory_space<vmem>>, vector<2x32xf32>,
    %c0_10 = arith.constant 0 : index
    %c0_11 = arith.constant 0 : index
    %11 = vector.load %arg7[%c0_10, %c0_11] : memref<2x1xf32, #tpu.memory_space<vmem>>, vector<2x1xf32>
    %cst_12 = arith.constant dense<0.000000e+00> : vector<2x1xf32>
    %12 = vector.multi_reduction <add>, %4, %cst_12 [1] : vector<2x8x1xf32> to vector<2x1xf32>
    %13 = arith.addf %11, %12 : vector<2x1xf32>
    %c0_13 = arith.constant 0 : index
    %c0_14 = arith.constant 0 : index
    %14 = vector.load %arg7[%c0_13, %c0_14] : memref<2x1xf32, #tpu.memory_space<vmem>>, vector<2x1xf32>
    tpu.vector_store %arg7[%c0_13, %c0_14], %13 {strides = array<i32>} : memref<2x1xf32, #tpu.memory_space<vmem>>, vector<2x1xf32>,
    %c0_i32_15 = arith.constant 0 : i32
    %15 = arith.cmpi eq, %arg1, %c0_i32_15 : i32
    %16 = arith.extui %15 : i1 to i32
    %c0_i32_16 = arith.constant 0 : i32
    %17 = arith.cmpi ne, %16, %c0_i32_16 : i32
    scf.if %17 {
      %c0_17 = arith.constant 0 : index
      %c0_18 = arith.constant 0 : index
      %18 = vector.load %arg7[%c0_17, %c0_18] : memref<2x1xf32, #tpu.memory_space<vmem>>, vector<2x1xf32>
      %cst_19 = arith.constant 9.99999971E-10 : f32
      %19 = vector.broadcast %cst_19 : f32 to vector<2x1xf32>
      %20 = arith.maximumf %18, %19 : vector<2x1xf32>
      %21 = tpu.reciprocal %20 {approx = true} : vector<2x1xf32> -> vector<2x1xf32>
      %c0_20 = arith.constant 0 : index
      %c0_21 = arith.constant 0 : index
      %22 = vector.load %arg6[%c0_20, %c0_21] : memref<2x32xf32, #tpu.memory_space<vmem>>, vector<2x32xf32>
      %23 = vector.broadcast %21 : vector<2x1xf32> to vector<2x32xf32>
      %24 = arith.mulf %22, %23 : vector<2x32xf32>
      %c0_22 = arith.constant 0 : index
      %c0_23 = arith.constant 0 : index
      %25 = vector.load %arg4[%c0_22, %c0_23] : memref<32x128xf32, #tpu.memory_space<vmem>>, vector<32x128xf32>
      %cst_24 = arith.constant dense<0.000000e+00> : vector<2x128xf32>
      %26 = tpu.matmul %24, %25, %cst_24 {dimension_numbers = #tpu.dot_dimension_numbers<[1], [0], [0], [1], [0, 0, 1, 1], [], []>} : vector<2x32xf32>, vector<32x128xf32>, vector<2x128xf32> -> vector<2x128xf32>
      %27 = arith.mulf %26, %26 : vector<2x128xf32>
      %cst_25 = arith.constant dense<0.000000e+00> : vector<2xf32>
      %28 = vector.multi_reduction <add>, %27, %cst_25 [1] : vector<2x128xf32> to vector<2xf32>
      %29 = vector.shape_cast %28 : vector<2xf32> to vector<2x1xf32>
      %cst_26 = arith.constant 1.000000e-24 : f32
      %30 = vector.broadcast %cst_26 : f32 to vector<2x1xf32>
      %31 = arith.maximumf %29, %30 : vector<2x1xf32>
      %32 = math.rsqrt %31 : vector<2x1xf32>
      %33 = vector.broadcast %32 : vector<2x1xf32> to vector<2x128xf32>
      %34 = arith.mulf %26, %33 : vector<2x128xf32>
      %c0_27 = arith.constant 0 : index
      %c0_28 = arith.constant 0 : index
      %35 = vector.load %arg5[%c0_27, %c0_28] : memref<2x128xf32, #tpu.memory_space<vmem>>, vector<2x128xf32>
      tpu.vector_store %arg5[%c0_27, %c0_28], %34 {strides = array<i32>} : memref<2x128xf32, #tpu.memory_space<vmem>>, vector<2x128xf32>,
    } else {
    }
    return
  }
  func.func @transform_0(%arg0: i32, %arg1: i32) -> (i32, i32, i32) {
    %c0_i32 = arith.constant 0 : i32
    %c0_i32_0 = arith.constant 0 : i32
    return %arg0, %arg1, %c0_i32 : i32, i32, i32
  }
  func.func @transform_1(%arg0: i32, %arg1: i32) -> (i32, i32, i32) {
    %c0_i32 = arith.constant 0 : i32
    %c0_i32_0 = arith.constant 0 : i32
    return %arg0, %arg1, %c0_i32 : i32, i32, i32
  }
  func.func @transform_2(%arg0: i32, %arg1: i32) -> (i32, i32) {
    %c0_i32 = arith.constant 0 : i32
    %c0_i32_0 = arith.constant 0 : i32
    %c0_i32_1 = arith.constant 0 : i32
    return %c0_i32, %c0_i32_0 : i32, i32
  }
  func.func @transform_3(%arg0: i32, %arg1: i32) -> (i32, i32) {
    %c0_i32 = arith.constant 0 : i32
    %c0_i32_0 = arith.constant 0 : i32
    return %arg0, %c0_i32 : i32, i32
  }
}

</mosaic_0001>

<llo_original>
// kernel: tpu_custom_call.1
$region0: #{tpu_custom_call.1}
  #allocation0 [shape = 'u32[]', space=smem, size = 0x4, offset = 0x4, fixed_abs, tag = 'smem constant byte address 0x4 - core index']
  #allocation1 [shape = 'u32[144,128]{1,0:T(1,128)}', space=vmem, size = 0x12000, scoped, tag = 'internal scratch']
  #allocation2 [shape = 'f32[2,32]{1,0:T(2,128)}', space=vmem, size = 0x400, scoped, tag = 'scratch operand']
  #allocation3 [shape = 'f32[2,1]{1,0:T(2,128)}', space=vmem, size = 0x400, scoped, tag = 'scratch operand']
  %s0 = inlined_call_operand.vmem [shape: f32[2,8,32], index: 0, kind: input, shape index: {}]
  %s1 = inlined_call_operand.vmem [shape: f32[2,8,1], index: 1, kind: input, shape index: {}]
  %s2 = inlined_call_operand.hbm [shape: f32[32,128], index: 2, kind: input, shape index: {}]
  %s3 = inlined_call_operand.hbm [shape: f32[2,128], index: 3, kind: output, shape index: {}]
  %s4 = sld [smem:[#allocation0]]
  $region34: #{tpu_custom_call.1} parent=0
    _
  %s6 = ssub.s32 1, %s4
  %s7 = scalar_select 0, %s6, %s4
  $region1: #{tpu_custom_call.1} parent=0
    #allocation4 [shape = 'u8[16384]{0}', space=vmem, size = 0x4000, scoped, tag = 'input window, operand 2, single buffered']
    #allocation5 [shape = 's32[1]{0}', space=sflag, size = 0x4, scoped, tag = 'scoped memory for tpu_custom_call.1']
    #allocation6 [shape = 's32[1]{0}', space=sflag, size = 0x4, scoped, tag = 'scoped memory for tpu_custom_call.1']
    #allocation7 [shape = 'u8[1024]{0}', space=vmem, size = 0x400, scoped, tag = 'output window, operand 0, single buffered']
    %8 = vsyncpa [#allocation5], 0
    %9 = vsyncpa [#allocation6], 0
    // Predicated region
    $region2: #{tpu_custom_call.1} parent=1 // pred_check
      _
    $region3: #{tpu_custom_call.1} parent=1 // pred_check_branch
      %11 = sbr.rel (0) target = $region5
    $region4: #{tpu_custom_call.1} parent=1 // pred_region
      _
    $region5: #{tpu_custom_call.1} parent=1 // pred_fallthru
      _
    // Predicated region
    $region6: #{tpu_custom_call.1} parent=1 // pred_check
      _
    $region7: #{tpu_custom_call.1} parent=1 // pred_check_branch
      %13 = sbr.rel (0) target = $region9
    $region8: #{tpu_custom_call.1} parent=1 // pred_region
      _
    $region9: #{tpu_custom_call.1} parent=1 // pred_fallthru
      _
    // Predicated region
    $region10: #{tpu_custom_call.1} parent=1 // pred_check
      _
    $region11: #{tpu_custom_call.1} parent=1 // pred_check_branch
      %15 = sbr.rel (0) target = $region13
    $region12: #{tpu_custom_call.1} parent=1 // pred_region
      %s17 = ssub.s32 512, 512
      %18 = vsyncadd [#allocation5], %s17
      %s19 = sshll.u32 [#allocation4], 4
      %s20 = int_to_ptr.vmem [resolvable:$true] %s19
      %25 = dma.hbm_to_vmem [thread:$0]  %s2, 512, %s20, [#allocation5], 128, 128, 8
    $region13: #{tpu_custom_call.1} parent=1 // pred_fallthru
      _
    // Predicated region
    $region14: #{tpu_custom_call.1} parent=1 // pred_check
      _
    $region15: #{tpu_custom_call.1} parent=1 // pred_check_branch
      %27 = sbr.rel (0) target = $region17
    $region16: #{tpu_custom_call.1} parent=1 // pred_region
      %28 = dma.done [#allocation5], 512
    $region17: #{tpu_custom_call.1} parent=1 // pred_fallthru
      _
    %p29 = scmp.eq.s32.totalorder 0, 0
    // Predicated region
    $region18: #{tpu_custom_call.1} parent=1 // pred_check
      %p30 = pneg %p29
    $region19: #{tpu_custom_call.1} parent=1 // pred_check_branch
      %32 = sbr.rel (%p30) target = $region21
    $region20: #{tpu_custom_call.1} parent=1 // pred_region
      %vm33 = vcmask 254976
      %34 = vst.msk [vmem:[#allocation2] sm:$0x3] %vm33, 0.0
      %vm35 = vcmask 1024
      %36 = vst.msk [vmem:[#allocation3] sm:$0x3] %vm35, 0.0
    $region21: #{tpu_custom_call.1} parent=1 // pred_fallthru
      _
    %v37 = vld [vmem:[%s0] sm:$0xff]
    %v38 = vld [vmem:[%s0 + $0x8] sm:$0xff]
    %v39 = vld [vmem:[%s1] sm:$0xff]
    %v40 = vld [vmem:[%s1 + $0x8] sm:$0xff]
    %42 = vset.pattern.permute.xlu0 0
    %43 = vperm.xlu0 %42, %v39
    %v44 = vpop.permute.xlu0 %43
    %47 = vset.pattern.permute.xlu0 0
    %48 = vperm.xlu0 %47, %v40
    %v49 = vpop.permute.xlu0 %48
    %v51 = vmul.f32 %v37, %v44
    %v52 = vmul.f32 %v38, %v49
    %v53 = vld [vmem:[#allocation2] sm:$0x3]
    %vm54 = vcmask 261120
    %v55 = vsel %vm54, %v51, 0.0
    %v56 = vrot.slane %v55, 4
    %v57 = vadd.f32 %v55, %v56
    %v58 = vrot.slane %v57, 2
    %v59 = vadd.f32 %v57, %v58
    %v60 = vrot.slane %v59, 1
    %v61 = vadd.f32 %v59, %v60
    %v62 = vsel %vm54, %v52, 0.0
    %v63 = vrot.slane %v62, 4
    %v64 = vadd.f32 %v62, %v63
    %v65 = vrot.slane %v64, 2
    %v66 = vadd.f32 %v64, %v65
    %v67 = vrot.slane %v66, 1
    %v68 = vadd.f32 %v66, %v67
    %vm71 = vcmask 1041409
    %v72 = vsel %vm71, %v68, %v61
    %v74 = vadd.f32 %v53, %v72
    %vm75 = vcmask 254976
    %76 = vst.msk [vmem:[#allocation2] sm:$0x3] %vm75, %v74
    %v77 = vld [vmem:[#allocation3] sm:$0x3]
    %vm78 = vcmask 7168
    %v79 = vsel %vm78, %v39, 0.0
    %v80 = vrot.slane %v79, 4
    %v81 = vadd.f32 %v79, %v80
    %v82 = vrot.slane %v81, 2
    %v83 = vadd.f32 %v81, %v82
    %v84 = vrot.slane %v83, 1
    %v85 = vadd.f32 %v83, %v84
    %v86 = vsel %vm78, %v40, 0.0
    %v87 = vrot.slane %v86, 4
    %v88 = vadd.f32 %v86, %v87
    %v89 = vrot.slane %v88, 2
    %v90 = vadd.f32 %v88, %v89
    %v91 = vrot.slane %v90, 1
    %v92 = vadd.f32 %v90, %v91
    %v95 = vsel %vm71, %v92, %v85
    %v97 = vadd.f32 %v77, %v95
    %vm98 = vcmask 1024
    %99 = vst.msk [vmem:[#allocation3] sm:$0x3] %vm98, %v97
    // Predicated region
    $region22: #{tpu_custom_call.1} parent=1 // pred_check
      %p100 = pneg %p29
    $region23: #{tpu_custom_call.1} parent=1 // pred_check_branch
      %102 = sbr.rel (%p100) target = $region25
    $region24: #{tpu_custom_call.1} parent=1 // pred_region
      %v103 = vld [vmem:[#allocation3] sm:$0x3]
      %v104 = vmax.f32 %v103, 1e-09
      %v105 = vrcp.pop %v104
      %v106 = vld [vmem:[#allocation2] sm:$0x3]
      %108 = vset.pattern.permute.xlu0 0
      %109 = vperm.xlu0 %108, %v105
      %v110 = vpop.permute.xlu0 %109
      %v112 = vmul.f32 %v106, %v110
      %v113 = vld [vmem:[#allocation4] sm:$0xff]
      %v114 = vld [vmem:[#allocation4 + $0x8] sm:$0xff]
      %v115 = vld [vmem:[#allocation4 + $0x10] sm:$0xff]
      %v116 = vld [vmem:[#allocation4 + $0x18] sm:$0xff]
      %v118 = vsel %vm54, %v112, 0
      %120 = vmatprep.subr.mxu0 0.0
      %121 = vmatpush1.msra.mxu0 0.0
      %122 = vmatprep.subr.mxu0 0.0
      %123 = vmatpush1.msra.mxu0 0.0
      %124 = vmatprep.subr.mxu0 0.0
      %125 = vmatpush1.msra.mxu0 0.0
      %126 = vmatprep.subr.mxu0 0.0
      %127 = vmatpush1.msra.mxu0 0.0
      %128 = vmatprep.subr.mxu0 0.0
      %129 = vmatpush1.msra.mxu0 0.0
      %130 = vmatprep.subr.mxu0 0.0
      %131 = vmatpush1.msra.mxu0 0.0
      %132 = vmatprep.subr.mxu0 0.0
      %133 = vmatpush1.msra.mxu0 0.0
      %134 = vmatprep.subr.mxu0 0.0
      %135 = vmatpush1.msra.mxu0 0.0
      %136 = vmatprep.subr.mxu0 0.0
      %137 = vmatpush1.msra.mxu0 0.0
      %138 = vmatprep.subr.mxu0 0.0
      %139 = vmatpush1.msra.mxu0 0.0
      %140 = vmatprep.subr.mxu0 0.0
      %141 = vmatpush1.msra.mxu0 0.0
      %142 = vmatprep.subr.mxu0 0.0
      %143 = vmatpush1.msra.mxu0 0.0
      %144 = vmatprep.subr.mxu0 0.0
      %145 = vmatpush1.msra.mxu0 %v116
      %146 = vmatprep.subr.mxu0 0.0
      %147 = vmatpush1.msra.mxu0 %v115
      %148 = vmatprep.subr.mxu0 0.0
      %149 = vmatpush1.msra.mxu0 %v114
      %150 = vmatprep.subr.mxu0 0.0
      %151 = vmatpush1.msra.mxu0 %v113
      %152 = vmatprep.subr.mxu0 0.0
      %153 = vmatpush2.msra.mxu0 0.0
      %154 = vmatprep.subr.mxu0 0.0
      %155 = vmatpush2.msra.mxu0 0.0
      %156 = vmatprep.subr.mxu0 0.0
      %157 = vmatpush2.msra.mxu0 0.0
      %158 = vmatprep.subr.mxu0 0.0
      %159 = vmatpush2.msra.mxu0 0.0
      %160 = vmatprep.subr.mxu0 0.0
      %161 = vmatpush2.msra.mxu0 0.0
      %162 = vmatprep.subr.mxu0 0.0
      %163 = vmatpush2.msra.mxu0 0.0
      %164 = vmatprep.subr.mxu0 0.0
      %165 = vmatpush2.msra.mxu0 0.0
      %166 = vmatprep.subr.mxu0 0.0
      %167 = vmatpush2.msra.mxu0 0.0
      %168 = vmatprep.subr.mxu0 0.0
      %169 = vmatpush2.msra.mxu0 0.0
      %170 = vmatprep.subr.mxu0 0.0
      %171 = vmatpush2.msra.mxu0 0.0
      %172 = vmatprep.subr.mxu0 0.0
      %173 = vmatpush2.msra.mxu0 0.0
      %174 = vmatprep.subr.mxu0 0.0
      %175 = vmatpush2.msra.mxu0 0.0
      %176 = vmatprep.subr.mxu0 0.0
      %177 = vmatpush2.msra.mxu0 0.0
      %178 = vmatprep.subr.mxu0 0.0
      %179 = vmatpush2.msra.mxu0 0.0
      %180 = vmatprep.subr.mxu0 0.0
      %181 = vmatpush2.msra.mxu0 0.0
      %182 = vmatprep.subr.mxu0 0.0
      %183 = vmatpush2.msra.mxu0 0.0
      %184 = vmatprep.mubr.f32.mxu0 0.0
      %185 = vmatmul.mubr.f32.gmra.mxu0 %v118
      %v186 = vpop.f32.mrf.mxu0
      %v187 = vadd.f32 0.0, %v186
      %v188 = vpop.f32.mrf.mxu0
      %189 = vdwg.mxu0
      %v190 = vmul.f32 %v187, %v187
      %vm191 = vcmask 1041408
      %v192 = vsel %vm191, %v190, 0.0
      %193 = vadd.xlane.f32.xlu0 %v192
      %v194 = vpop.xlane.xlu0 %193
      %v195 = vmax.f32 %v194, 1e-24
      %v196 = vrsqrt.pop %v195
      %v197 = vmul.f32 %v187, %v196
      %198 = vst [vmem:[#allocation7] sm:$0x3] %v197
    $region25: #{tpu_custom_call.1} parent=1 // pred_fallthru
      _
    // Predicated region
    $region26: #{tpu_custom_call.1} parent=1 // pred_check
      _
    $region27: #{tpu_custom_call.1} parent=1 // pred_check_branch
      %200 = sbr.rel (0) target = $region29
    $region28: #{tpu_custom_call.1} parent=1 // pred_region
      %s202 = ssub.s32 32, 32
      %203 = vsyncadd [#allocation6], %s202
      %s205 = sshll.u32 [#allocation7], 4
      %s206 = int_to_ptr.vmem [resolvable:$true] %s205
      %208 = dma.vmem_to_hbm [thread:$0]  %s206, 32, %s3, [#allocation6]
    $region29: #{tpu_custom_call.1} parent=1 // pred_fallthru
      _
    // Predicated region
    $region30: #{tpu_custom_call.1} parent=1 // pred_check
      _
    $region31: #{tpu_custom_call.1} parent=1 // pred_check_branch
      %210 = sbr.rel (0) target = $region33
    $region32: #{tpu_custom_call.1} parent=1 // pred_region
      %211 = dma.done [#allocation6], 32
    $region33: #{tpu_custom_call.1} parent=1 // pred_fallthru
      _
    %212 = vsyncpa [#allocation5], 1
    %213 = vsyncpa [#allocation6], 1

</llo_original>
